<compile_context>
chip_gen: v5e
topology: v5e:2x2
jax: 0.10.0
libtpu: 0.0.40
codegen_flags: <defaults>
</compile_context>

<pallas_src>
import math
from functools import partial

import jax
import jax.numpy as jnp
from jax.experimental import pallas as pl
from jax.experimental.pallas import tpu as pltpu


def _hologram_kernel(wl_ref,              # SMEM: (C,) wavelengths
                     tmax_ref,            # SMEM: (1,) max(thickness)
                     fre_ref, fim_ref,    # VMEM: (Bc, 1, TR, L) field real / imag
                     tm_ref,              # VMEM: (2, TR, L)  [0]=thickness, [1]=mask
                     ore_ref, oim_ref,    # VMEM: (Bc, 1, TR, L) output real / imag
                     psr_ref, psi_ref,    # VMEM scratch: (TR, L) cached phase shift
                     *, eps, tand):
    # All program_id reads at the top level (never inside pl.when bodies).
    c = pl.program_id(0)          # wavelength index
    b = pl.program_id(2)          # batch-chunk index (innermost, sequential)

    lam = wl_ref[c]
    t_max = tmax_ref[0]
    k = jnp.float32(2.0 * math.pi) / lam
    sqrt_eps = jnp.sqrt(jnp.float32(eps))

    # Rebuild the masked phase shift only when the batch-chunk index wraps to 0,
    # i.e. once per (wavelength, spatial tile); cached in VMEM scratch.
    @pl.when(b == 0)
    def _():
        t = tm_ref[0]
        m = tm_ref[1]
        loss = jnp.exp(jnp.float32(-0.5) * k * t * jnp.float32(tand) * sqrt_eps)
        theta = -k * (t * (sqrt_eps - jnp.float32(1.0)) + t_max)
        psr_ref[...] = m * (loss * jnp.cos(theta))
        psi_ref[...] = m * (loss * jnp.sin(theta))

    # Steady state: masked complex multiply only (pure HBM-streaming work).
    fre = fre_ref[:, 0]           # (Bc, TR, L)
    fim = fim_ref[:, 0]
    psr = psr_ref[...]            # (TR, L), broadcast over the batch chunk
    psi = psi_ref[...]
    ore_ref[:, 0] = fre * psr - fim * psi
    oim_ref[:, 0] = fre * psi + fim * psr


def _vmem_capacity_bytes():
    try:
        return int(pltpu.get_tpu_info().vmem_capacity_bytes)
    except Exception:
        return 128 * 1024 * 1024      # v5e/v6e-like default (also used off-TPU)


def _plan_tiling(HW, B):
    """Lane-dense tiling plan: 128 lanes, multiple-of-8 row tiles, batch chunks."""
    lanes = 128
    rows_raw = -(-HW // lanes)                                   # cdiv
    # Batch chunk: largest divisor of B that is <= 8 (no batch padding needed).
    bc = max(d for d in range(1, min(B, 8) + 1) if B % d == 0)
    # Generation-aware per-buffer tile target (v7x: 64 MiB VMEM per TensorCore).
    vmem_cap = _vmem_capacity_bytes()
    target_bytes = (3 << 20) if vmem_cap > (64 << 20) else (3 << 19)   # 3 / 1.5 MiB
    max_tr = max(8, (target_bytes // (bc * lanes * 4)) // 8 * 8)
    if rows_raw <= max_tr:
        tr, rows, s = rows_raw, rows_raw, 1        # single tile == full array dims
    else:
        tr = max_tr
        rows = -(-rows_raw // tr) * tr             # pad rows to a multiple of TR
        s = rows // tr
    pad = rows * lanes - HW
    # VMEM: 4 field arrays (2 in + 2 out) + 1 packed spatial input, double-buffered,
    # plus 2 scratch planes; add headroom for compiler temporaries.
    tile_field = bc * tr * lanes * 4
    tile_spatial = 2 * tr * lanes * 4
    vmem_needed = 2 * (4 * tile_field + tile_spatial) + tile_spatial
    vmem_limit = min(max(vmem_needed + (16 << 20), 32 << 20), vmem_cap - (8 << 20))
    return lanes, rows, tr, s, bc, pad, int(vmem_limit)


def _aperture_mask(H, W, dx, dy):
    """Circular aperture mask — shared by the kernel wrapper and the reference."""
    r = max(dx * H, dy * W) / 2.0
    x = jnp.linspace(-dx * H / 2, dx * H / 2, H, dtype=jnp.float32)
    y = jnp.linspace(-dy * W / 2, dy * W / 2, W, dtype=jnp.float32)
    X, Y = jnp.meshgrid(x, y, indexing="ij")       # torch.meshgrid default is 'ij'
    R = jnp.sqrt(X * X + Y * Y)
    return jnp.where(R <= jnp.float32(r), 1.0, 0.0).astype(jnp.float32)


def hologram_forward(field_data, wavelengths, thickness, spacing, eps, tand):
    """JAX/Pallas equivalent of old_HologramElement.forward (circ_aperture=True)."""
    B, C, H, W = field_data.shape
    dx, dy = float(spacing[0]), float(spacing[1])
    HW = H * W

    # ---- grid-invariant precomputation (plain JAX, done once) --------------
    th = thickness.astype(jnp.float32)
    t_max = jnp.max(th).reshape(1)                 # scalar, held in SMEM
    mask = _aperture_mask(H, W, dx, dy)
    wl = wavelengths.reshape(-1).astype(jnp.float32)

    lanes, rows, TR, S, Bc, pad, vmem_limit = _plan_tiling(HW, B)
    NB = B // Bc

    def to_lane_dense(a, leading):
        flat = a.reshape(leading + (HW,))
        if pad:
            flat = jnp.pad(flat, [(0, 0)] * len(leading) + [(0, pad)])
        return flat.reshape(leading + (rows, lanes))

    fre = to_lane_dense(jnp.real(field_data).astype(jnp.float32), (B, C))
    fim = to_lane_dense(jnp.imag(field_data).astype(jnp.float32), (B, C))
    th_mask = jnp.stack([to_lane_dense(th, ()), to_lane_dense(mask, ())], axis=0)

    kernel = partial(_hologram_kernel, eps=float(eps), tand=float(tand))

    grid_spec = pltpu.PrefetchScalarGridSpec(
        num_scalar_prefetch=0,
        grid=(C, S, NB),
        in_specs=[
            pl.BlockSpec(memory_space=pltpu.MemorySpace.SMEM),   # wavelengths (C,)
            pl.BlockSpec(memory_space=pltpu.MemorySpace.SMEM),   # t_max (1,)
            pl.BlockSpec((Bc, 1, TR, lanes), lambda c, s, b: (b, c, s, 0)),  # field re
            pl.BlockSpec((Bc, 1, TR, lanes), lambda c, s, b: (b, c, s, 0)),  # field im
            pl.BlockSpec((2, TR, lanes), lambda c, s, b: (0, s, 0)),         # t + mask
        ],
        out_specs=[
            pl.BlockSpec((Bc, 1, TR, lanes), lambda c, s, b: (b, c, s, 0)),  # out re
            pl.BlockSpec((Bc, 1, TR, lanes), lambda c, s, b: (b, c, s, 0)),  # out im
        ],
        scratch_shapes=[
            pltpu.VMEM((TR, lanes), jnp.float32),   # cached ps_re (masked)
            pltpu.VMEM((TR, lanes), jnp.float32),   # cached ps_im (masked)
        ],
    )

    out_re, out_im = pl.pallas_call(
        kernel,
        grid_spec=grid_spec,
        out_shape=(jax.ShapeDtypeStruct((B, C, rows, lanes), jnp.float32),
                   jax.ShapeDtypeStruct((B, C, rows, lanes), jnp.float32)),
        compiler_params=pltpu.CompilerParams(
            # The last (batch-chunk) axis must stay "arbitrary": the VMEM
            # phase-shift cache relies on it running sequentially from 0.
            dimension_semantics=("parallel", "parallel", "arbitrary"),
            vmem_limit_bytes=vmem_limit),
    )(wl, t_max, fre, fim, th_mask)

    out = jax.lax.complex(out_re, out_im)                       # complex64
    out = out.reshape(B, C, rows * lanes)[:, :, :HW].reshape(B, C, H, W)
    return out


def hologram_reference(field_data, wavelengths, thickness, spacing, eps, tand):
    """Pure-JAX transcription of the PyTorch forward, for validation."""
    dx, dy = float(spacing[0]), float(spacing[1])
    H, W = thickness.shape
    lam = wavelengths.reshape(-1)[:, None, None].astype(jnp.float32)
    t = thickness[None, :, :].astype(jnp.float32)
    sqrt_eps = jnp.sqrt(jnp.float32(eps))
    loss = jnp.exp(-0.5 * (2 * jnp.pi / lam) * t * tand * sqrt_eps)
    phase_delay = jnp.exp(-1j * (2 * jnp.pi / lam) * t * (sqrt_eps - 1))
    air_phase = jnp.exp(-1j * (2 * jnp.pi / lam) * jnp.max(t))
    ps = loss * phase_delay * air_phase
    mask = _aperture_mask(H, W, dx, dy)
    return mask[None, None] * field_data * ps[None]


if __name__ == "__main__":
    # Small synthetic shapes: batch=2, wavelengths(C)=4, spatial=16x16
    B, C, H, W = 2, 4, 16, 16

    key = jax.random.PRNGKey(0)
    k1, k2, k3 = jax.random.split(key, 3)

    # deterministic synthetic "parameters" (module __init__ inputs)
    thickness = jax.random.uniform(k1, (H, W), jnp.float32) * 1e-3    # up to 1 mm
    material = (3.0, 0.01)                                            # [epsilon, tand]
    eps, tand = material
    spacing = (1e-3, 1e-3)                                            # dx, dy

    # deterministic synthetic input field (complex) and wavelengths
    wavelengths = jnp.linspace(0.8e-3, 1.2e-3, C, dtype=jnp.float32)
    f_re = jax.random.normal(k2, (B, C, H, W), jnp.float32)
    f_im = jax.random.normal(k3, (B, C, H, W), jnp.float32)
    field_data = (f_re + 1j * f_im).astype(jnp.complex64)

    out = hologram_forward(field_data, wavelengths, thickness, spacing, eps, tand)
    out = jax.block_until_ready(out)

    ref = hologram_reference(field_data, wavelengths, thickness, spacing, eps, tand)
    assert out.shape == (B, C, H, W) and out.dtype == jnp.complex64
    assert jnp.allclose(out, ref, rtol=1e-3, atol=1e-5), "Pallas output mismatch vs reference"

    print("KERNEL_OK")
</pallas_src>

<mosaic_0001>
module attributes {stable_mosaic.version = 11 : i64} {
  func.func @_hologram_kernel(%arg0: i32, %arg1: i32, %arg2: i32, %arg3: memref<4xf32, #tpu.memory_space<smem>>, %arg4: memref<1xf32, #tpu.memory_space<smem>>, %arg5: memref<2x1x2x128xf32, #tpu.memory_space<vmem>>, %arg6: memref<2x1x2x128xf32, #tpu.memory_space<vmem>>, %arg7: memref<2x2x128xf32, #tpu.memory_space<vmem>>, %arg8: memref<2x1x2x128xf32, #tpu.memory_space<vmem>>, %arg9: memref<2x1x2x128xf32, #tpu.memory_space<vmem>>, %arg10: memref<2x128xf32, #tpu.memory_space<vmem>>, %arg11: memref<2x128xf32, #tpu.memory_space<vmem>>) attributes {dimension_semantics = [#tpu.dimension_semantics<parallel>, #tpu.dimension_semantics<parallel>, #tpu.dimension_semantics<arbitrary>], iteration_bounds = array<i64: 4, 1, 1>, scalar_prefetch = 0 : i64, scratch_operands = 2 : i64, tpu.core_type = #tpu.core_type<tc>, window_params = [{transform_indices = @transform_0, window_bounds = array<i64: 4>}, {transform_indices = @transform_1, window_bounds = array<i64: 1>}, {transform_indices = @transform_2, window_bounds = array<i64: 2, 1, 2, 128>}, {transform_indices = @transform_3, window_bounds = array<i64: 2, 1, 2, 128>}, {transform_indices = @transform_4, window_bounds = array<i64: 2, 2, 128>}, {transform_indices = @transform_5, window_bounds = array<i64: 2, 1, 2, 128>}, {transform_indices = @transform_6, window_bounds = array<i64: 2, 1, 2, 128>}]} {
    %0 = arith.index_cast %arg0 : i32 to index
    %1 = memref.load %arg3[%0] : memref<4xf32, #tpu.memory_space<smem>>
    %c0 = arith.constant 0 : index
    %2 = memref.load %arg4[%c0] : memref<1xf32, #tpu.memory_space<smem>>
    %cst = arith.constant 6.28318548 : f32
    %3 = arith.divf %cst, %1 : f32
    %cst_0 = arith.constant 3.000000e+00 : f32
    %4 = math.sqrt %cst_0 : f32
    %c0_i32 = arith.constant 0 : i32
    %5 = arith.cmpi eq, %arg2, %c0_i32 : i32
    %6 = arith.extui %5 : i1 to i32
    %c0_i32_1 = arith.constant 0 : i32
    %7 = arith.cmpi ne, %6, %c0_i32_1 : i32
    scf.if %7 {
      %c0_22 = arith.constant 0 : index
      %c0_23 = arith.constant 0 : index
      %c0_24 = arith.constant 0 : index
      %34 = vector.load %arg7[%c0_22, %c0_23, %c0_24] : memref<2x2x128xf32, #tpu.memory_space<vmem>>, vector<1x2x128xf32>
      %35 = vector.shape_cast %34 : vector<1x2x128xf32> to vector<2x128xf32>
      %c1 = arith.constant 1 : index
      %c0_25 = arith.constant 0 : index
      %c0_26 = arith.constant 0 : index
      %36 = vector.load %arg7[%c1, %c0_25, %c0_26] : memref<2x2x128xf32, #tpu.memory_space<vmem>>, vector<1x2x128xf32>
      %37 = vector.shape_cast %36 : vector<1x2x128xf32> to vector<2x128xf32>
      %cst_27 = arith.constant -5.000000e-01 : f32
      %38 = arith.mulf %cst_27, %3 : f32
      %39 = vector.broadcast %38 : f32 to vector<2x128xf32>
      %40 = arith.mulf %39, %35 : vector<2x128xf32>
      %cst_28 = arith.constant 0.00999999977 : f32
      %41 = vector.broadcast %cst_28 : f32 to vector<2x128xf32>
      %42 = arith.mulf %40, %41 : vector<2x128xf32>
      %43 = vector.broadcast %4 : f32 to vector<2x128xf32>
      %44 = arith.mulf %42, %43 : vector<2x128xf32>
      %45 = math.exp %44 : vector<2x128xf32>
      %cst_29 = arith.constant 0.000000e+00 : f32
      %46 = arith.subf %cst_29, %3 : f32
      %cst_30 = arith.constant 1.000000e+00 : f32
      %47 = arith.subf %4, %cst_30 : f32
      %48 = vector.broadcast %47 : f32 to vector<2x128xf32>
      %49 = arith.mulf %35, %48 : vector<2x128xf32>
      %50 = vector.broadcast %2 : f32 to vector<2x128xf32>
      %51 = arith.addf %49, %50 : vector<2x128xf32>
      %52 = vector.broadcast %46 : f32 to vector<2x128xf32>
      %53 = arith.mulf %52, %51 : vector<2x128xf32>
      %54 = math.cos %53 : vector<2x128xf32>
      %55 = arith.mulf %45, %54 : vector<2x128xf32>
      %56 = arith.mulf %37, %55 : vector<2x128xf32>
      %c0_31 = arith.constant 0 : index
      %c0_32 = arith.constant 0 : index
      %57 = vector.load %arg10[%c0_31, %c0_32] : memref<2x128xf32, #tpu.memory_space<vmem>>, vector<2x128xf32>
      tpu.vector_store %arg10[%c0_31, %c0_32], %56 {strides = array<i32>} : memref<2x128xf32, #tpu.memory_space<vmem>>, vector<2x128xf32>,
      %58 = math.sin %53 : vector<2x128xf32>
      %59 = arith.mulf %45, %58 : vector<2x128xf32>
      %60 = arith.mulf %37, %59 : vector<2x128xf32>
      %c0_33 = arith.constant 0 : index
      %c0_34 = arith.constant 0 : index
      %61 = vector.load %arg11[%c0_33, %c0_34] : memref<2x128xf32, #tpu.memory_space<vmem>>, vector<2x128xf32>
      tpu.vector_store %arg11[%c0_33, %c0_34], %60 {strides = array<i32>} : memref<2x128xf32, #tpu.memory_space<vmem>>, vector<2x128xf32>,
    } else {
    }
    %c0_2 = arith.constant 0 : index
    %c0_3 = arith.constant 0 : index
    %c0_4 = arith.constant 0 : index
    %c0_5 = arith.constant 0 : index
    %8 = vector.load %arg5[%c0_2, %c0_3, %c0_4, %c0_5] : memref<2x1x2x128xf32, #tpu.memory_space<vmem>>, vector<2x1x2x128xf32>
    %9 = vector.shape_cast %8 : vector<2x1x2x128xf32> to vector<2x2x128xf32>
    %c0_6 = arith.constant 0 : index
    %c0_7 = arith.constant 0 : index
    %c0_8 = arith.constant 0 : index
    %c0_9 = arith.constant 0 : index
    %10 = vector.load %arg6[%c0_6, %c0_7, %c0_8, %c0_9] : memref<2x1x2x128xf32, #tpu.memory_space<vmem>>, vector<2x1x2x128xf32>
    %11 = vector.shape_cast %10 : vector<2x1x2x128xf32> to vector<2x2x128xf32>
    %c0_10 = arith.constant 0 : index
    %c0_11 = arith.constant 0 : index
    %12 = vector.load %arg10[%c0_10, %c0_11] : memref<2x128xf32, #tpu.memory_space<vmem>>, vector<2x128xf32>
    %c0_12 = arith.constant 0 : index
    %c0_13 = arith.constant 0 : index
    %13 = vector.load %arg11[%c0_12, %c0_13] : memref<2x128xf32, #tpu.memory_space<vmem>>, vector<2x128xf32>
    %14 = vector.shape_cast %12 : vector<2x128xf32> to vector<1x2x128xf32>
    %15 = vector.broadcast %14 : vector<1x2x128xf32> to vector<2x2x128xf32>
    %16 = arith.mulf %9, %15 : vector<2x2x128xf32>
    %17 = vector.shape_cast %13 : vector<2x128xf32> to vector<1x2x128xf32>
    %18 = vector.broadcast %17 : vector<1x2x128xf32> to vector<2x2x128xf32>
    %19 = arith.mulf %11, %18 : vector<2x2x128xf32>
    %20 = arith.subf %16, %19 : vector<2x2x128xf32>
    %c0_14 = arith.constant 0 : index
    %c0_15 = arith.constant 0 : index
    %c0_16 = arith.constant 0 : index
    %c0_17 = arith.constant 0 : index
    %21 = vector.load %arg8[%c0_14, %c0_15, %c0_16, %c0_17] : memref<2x1x2x128xf32, #tpu.memory_space<vmem>>, vector<2x1x2x128xf32>
    %22 = vector.shape_cast %21 : vector<2x1x2x128xf32> to vector<2x2x128xf32>
    %23 = vector.shape_cast %20 : vector<2x2x128xf32> to vector<2x1x2x128xf32>
    tpu.vector_store %arg8[%c0_14, %c0_15, %c0_16, %c0_17], %23 {strides = array<i32>} : memref<2x1x2x128xf32, #tpu.memory_space<vmem>>, vector<2x1x2x128xf32>,
    %24 = vector.shape_cast %13 : vector<2x128xf32> to vector<1x2x128xf32>
    %25 = vector.broadcast %24 : vector<1x2x128xf32> to vector<2x2x128xf32>
    %26 = arith.mulf %9, %25 : vector<2x2x128xf32>
    %27 = vector.shape_cast %12 : vector<2x128xf32> to vector<1x2x128xf32>
    %28 = vector.broadcast %27 : vector<1x2x128xf32> to vector<2x2x128xf32>
    %29 = arith.mulf %11, %28 : vector<2x2x128xf32>
    %30 = arith.addf %26, %29 : vector<2x2x128xf32>
    %c0_18 = arith.constant 0 : index
    %c0_19 = arith.constant 0 : index
    %c0_20 = arith.constant 0 : index
    %c0_21 = arith.constant 0 : index
    %31 = vector.load %arg9[%c0_18, %c0_19, %c0_20, %c0_21] : memref<2x1x2x128xf32, #tpu.memory_space<vmem>>, vector<2x1x2x128xf32>
    %32 = vector.shape_cast %31 : vector<2x1x2x128xf32> to vector<2x2x128xf32>
    %33 = vector.shape_cast %30 : vector<2x2x128xf32> to vector<2x1x2x128xf32>
    tpu.vector_store %arg9[%c0_18, %c0_19, %c0_20, %c0_21], %33 {strides = array<i32>} : memref<2x1x2x128xf32, #tpu.memory_space<vmem>>, vector<2x1x2x128xf32>,
    return
  }
  func.func @transform_0(%arg0: i32, %arg1: i32, %arg2: i32) -> i32 {
    %c0_i32 = arith.constant 0 : i32
    %c0_i32_0 = arith.constant 0 : i32
    return %c0_i32 : i32
  }
  func.func @transform_1(%arg0: i32, %arg1: i32, %arg2: i32) -> i32 {
    %c0_i32 = arith.constant 0 : i32
    %c0_i32_0 = arith.constant 0 : i32
    return %c0_i32 : i32
  }
  func.func @transform_2(%arg0: i32, %arg1: i32, %arg2: i32) -> (i32, i32, i32, i32) {
    %c0_i32 = arith.constant 0 : i32
    %c0_i32_0 = arith.constant 0 : i32
    return %arg2, %arg0, %arg1, %c0_i32 : i32, i32, i32, i32
  }
  func.func @transform_3(%arg0: i32, %arg1: i32, %arg2: i32) -> (i32, i32, i32, i32) {
    %c0_i32 = arith.constant 0 : i32
    %c0_i32_0 = arith.constant 0 : i32
    return %arg2, %arg0, %arg1, %c0_i32 : i32, i32, i32, i32
  }
  func.func @transform_4(%arg0: i32, %arg1: i32, %arg2: i32) -> (i32, i32, i32) {
    %c0_i32 = arith.constant 0 : i32
    %c0_i32_0 = arith.constant 0 : i32
    %c0_i32_1 = arith.constant 0 : i32
    return %c0_i32, %arg1, %c0_i32_0 : i32, i32, i32
  }
  func.func @transform_5(%arg0: i32, %arg1: i32, %arg2: i32) -> (i32, i32, i32, i32) {
    %c0_i32 = arith.constant 0 : i32
    %c0_i32_0 = arith.constant 0 : i32
    return %arg2, %arg0, %arg1, %c0_i32 : i32, i32, i32, i32
  }
  func.func @transform_6(%arg0: i32, %arg1: i32, %arg2: i32) -> (i32, i32, i32, i32) {
    %c0_i32 = arith.constant 0 : i32
    %c0_i32_0 = arith.constant 0 : i32
    return %arg2, %arg0, %arg1, %c0_i32 : i32, i32, i32, i32
  }
}

</mosaic_0001>

<llo_original>
// kernel: tpu_custom_call.1
$region0: #{tpu_custom_call.1}
  #allocation0 [shape = 'u32[]', space=smem, size = 0x4, offset = 0x4, fixed_abs, tag = 'smem constant byte address 0x4 - core index']
  #allocation1 [shape = 'u32[72,128]{1,0:T(1,128)}', space=vmem, size = 0x9000, scoped, tag = 'internal scratch']
  #allocation2 [shape = 'f32[2,128]{1,0:T(2,128)}', space=vmem, size = 0x400, scoped, tag = 'scratch operand']
  #allocation3 [shape = 'f32[2,128]{1,0:T(2,128)}', space=vmem, size = 0x400, scoped, tag = 'scratch operand']
  #allocation4 [shape = 'f32[1]{0:T(128)S(6)}', space=smem, size = 0x200, scoped, tag = 'scoped memory for tpu_custom_call.1']
  %s0 = inlined_call_operand.hbm [shape: f32[4], index: 0, kind: input, shape index: {}]
  %s1 = inlined_call_operand.<no memory space> [shape: f32[1], index: 1, kind: input, shape index: {}]
  %s2 = inlined_call_operand.hbm [shape: f32[2,4,2,128], index: 2, kind: input, shape index: {}]
  %s3 = inlined_call_operand.hbm [shape: f32[2,4,2,128], index: 3, kind: input, shape index: {}]
  %s4 = inlined_call_operand.vmem [shape: f32[2,2,128], index: 4, kind: input, shape index: {}]
  %s5 = inlined_call_operand.hbm [shape: f32[2,4,2,128], index: 5, kind: output, shape index: {0}]
  %s6 = inlined_call_operand.hbm [shape: f32[2,4,2,128], index: 6, kind: output, shape index: {1}]
  %7 = xla_tuple %s5, %s6
  %s8 = sld [smem:[#allocation0]]
  $region77: #{tpu_custom_call.1} parent=0
    _
  %s10 = ssub.s32 1, %s8
  %s11 = scalar_select 0, %s10, %s8
  %12 = sst [smem:[#allocation4]] %s1
  $region1: #{tpu_custom_call.1} parent=0
    #allocation5 [shape = 'u8[512]{0}', space=smem, size = 0x200, scoped, tag = 'input window, operand 0, single buffered']
    #allocation6 [shape = 's32[2]{0}', space=sflag, size = 0x8, scoped, tag = 'scoped memory for tpu_custom_call.1']
    #allocation7 [shape = 's32[2]{0}', space=sflag, size = 0x8, scoped, tag = 'scoped memory for tpu_custom_call.1']
    #allocation8 [shape = 's32[2]{0}', space=sflag, size = 0x8, scoped, tag = 'scoped memory for tpu_custom_call.1']
    #allocation9 [shape = 'u8[4096]{0}', space=vmem, size = 0x1000, scoped, tag = 'input window, operand 2']
    #allocation10 [shape = 'u8[4096]{0}', space=vmem, size = 0x1000, scoped, tag = 'input window, operand 3']
    #allocation11 [shape = 's32[2]{0}', space=sflag, size = 0x8, scoped, tag = 'scoped memory for tpu_custom_call.1']
    #allocation12 [shape = 'u8[4096]{0}', space=vmem, size = 0x1000, scoped, tag = 'output window, operand 0']
    #allocation13 [shape = 'u8[4096]{0}', space=vmem, size = 0x1000, scoped, tag = 'output window, operand 1']
    #allocation14 [shape = 's32[2]{0}', space=sflag, size = 0x8, scoped, tag = 'scoped memory for tpu_custom_call.1']
    %13 = vsyncpa [#allocation8], 0
    %14 = vsyncpa [#allocation6], 0
    %s15 = scalar_lea.sflag [#allocation6], 1
    %16 = vsyncpa %s15, 0
    %17 = vsyncpa [#allocation11], 0
    %s18 = scalar_lea.sflag [#allocation11], 1
    %19 = vsyncpa %s18, 0
    %20 = vsyncpa [#allocation7], 0
    %s21 = scalar_lea.sflag [#allocation7], 1
    %22 = vsyncpa %s21, 0
    %23 = vsyncpa [#allocation14], 0
    %s24 = scalar_lea.sflag [#allocation14], 1
    %25 = vsyncpa %s24, 0
    loop: start=0, step=1, limit=6
    $region2: #{tpu_custom_call.1} parent=1 // loop_pre_header
      _
    $region3: #{tpu_custom_call.1} parent=1 // loop_header
      %s27 = sphi 0, %s31
      %p28 = scmp.ge.s32.totalorder %s27, 6
      %s34 = sphi 0, %s53
      %s35 = sphi 0, %s49
      %s36 = sphi 0, %s45
      %s37 = sphi 0, %s34
      %s38 = sphi 0, %s35
      %s39 = sphi 0, %s36
      %s40 = sphi 0, %s37
      %s41 = sphi 0, %s38
      %s42 = sphi 0, %s39
      %s54 = sphi 0, %s54
      %s56 = sphi 0, %s54
      %s57 = sphi 0, %s56
      %s71 = sphi 0, %s57
      %s75 = sphi 0, %s75
      %s77 = sphi 0, %s75
      %s78 = sphi 0, %s77
      %s92 = sphi 0, %s78
      %s102 = sphi 0, %s104
      %s105 = sphi 0, %s102
      %s106 = sphi 0, %s105
      %s122 = sphi 0, %s106
      %s132 = sphi 0, %s134
      %s135 = sphi 0, %s132
      %s136 = sphi 0, %s135
      %s152 = sphi 0, %s136
      %s158 = sphi 0, %s160
      %s161 = sphi 0, %s158
      %s162 = sphi 0, %s161
      %s178 = sphi 0, %s162
      %s188 = sphi 0, %s190
      %s191 = sphi 0, %s188
      %s192 = sphi 0, %s191
      %s208 = sphi 0, %s192
      %s218 = sphi 0, %s220
      %s221 = sphi 0, %s218
      %s222 = sphi 0, %s221
      %s238 = sphi 0, %s222
    $region4: #{tpu_custom_call.1} parent=1 // loop_header_branch
      %30 = sbr.rel (%p28) target = $region8
    $region5: #{tpu_custom_call.1} parent=1 // loop_body
      %s32 = ssub.s32 %s27, 1
      %s33 = ssub.s32 %s27, 2
      %s43 = sadd.s32 1, %s36
      %p44 = scmp.ge.s32.totalorder %s43, 1
      %s45 = scalar_select %p44, 0, %s43
      %s46 = sadd.s32 1, %s35
      %s47 = scalar_select %p44, %s46, %s35
      %p48 = scmp.ge.s32.totalorder %s47, 1
      %s49 = scalar_select %p48, 0, %s47
      %s50 = sadd.s32 1, %s34
      %s51 = scalar_select %p48, %s50, %s34
      %p52 = scmp.ge.s32.totalorder %s51, 4
      %s53 = scalar_select %p52, 0, %s51
      %s55 = sadd.s32 %s54, 1
      %p58 = scmp.eq.s32.totalorder %s27, 3
      %p59 = scmp.ne.s32.totalorder %s54, %s56
      %p60 = scmp.eq.s32.totalorder %s27, 0
      %p61 = por %p59, %p60
      %p62 = scmp.ne.s32.totalorder %s54, %s56
      %p63 = scmp.eq.s32.totalorder %s32, 3
      %p64 = por %p62, %p63
      %p65 = scmp.ne.s32.totalorder %s56, %s57
      %p66 = scmp.eq.s32.totalorder %s32, 0
      %p67 = por %p65, %p66
      %p68 = scmp.ne.s32.totalorder %s56, %s57
      %p69 = scmp.eq.s32.totalorder %s33, 3
      %p70 = por %p68, %p69
      %p72 = scmp.ne.s32.totalorder %s57, %s71
      %p73 = scmp.eq.s32.totalorder %s33, 0
      %p74 = por %p72, %p73
      %s76 = sadd.s32 %s75, 1
      %p79 = scmp.eq.s32.totalorder %s27, 3
      %p80 = scmp.ne.s32.totalorder %s75, %s77
      %p81 = scmp.eq.s32.totalorder %s27, 0
      %p82 = por %p80, %p81
      %p83 = scmp.ne.s32.totalorder %s75, %s77
      %p84 = scmp.eq.s32.totalorder %s32, 3
      %p85 = por %p83, %p84
      %p86 = scmp.ne.s32.totalorder %s77, %s78
      %p87 = scmp.eq.s32.totalorder %s32, 0
      %p88 = por %p86, %p87
      %p89 = scmp.ne.s32.totalorder %s77, %s78
      %p90 = scmp.eq.s32.totalorder %s33, 3
      %p91 = por %p89, %p90
      %p93 = scmp.ne.s32.totalorder %s78, %s92
      %p94 = scmp.eq.s32.totalorder %s33, 0
      %p95 = por %p93, %p94
      %s96 = ssub.s32 %s36, %s45
      %s97 = ssub.s32 %s34, %s53
      %s98 = sor.u32 %s96, %s97
      %s99 = ssub.s32 %s35, %s49
      %s100 = sor.u32 %s98, %s99
      %p101 = scmp.eq.s32.totalorder %s100, 0
      %s103 = sadd.s32 %s102, 1
      %s104 = scalar_select %p101, %s102, %s103
      %p107 = pneg %p101
      %p108 = scmp.eq.s32.totalorder %s27, 3
      %p109 = por %p107, %p108
      %p110 = scmp.ne.s32.totalorder %s102, %s105
      %p111 = scmp.eq.s32.totalorder %s27, 0
      %p112 = por %p110, %p111
      %p113 = scmp.ne.s32.totalorder %s102, %s105
      %p114 = scmp.eq.s32.totalorder %s32, 3
      %p115 = por %p113, %p114
      %p116 = scmp.ne.s32.totalorder %s105, %s106
      %p117 = scmp.eq.s32.totalorder %s32, 0
      %p118 = por %p116, %p117
      %p119 = scmp.ne.s32.totalorder %s105, %s106
      %p120 = scmp.eq.s32.totalorder %s33, 3
      %p121 = por %p119, %p120
      %p123 = scmp.ne.s32.totalorder %s106, %s122
      %p124 = scmp.eq.s32.totalorder %s33, 0
      %p125 = por %p123, %p124
      %s126 = ssub.s32 %s36, %s45
      %s127 = ssub.s32 %s34, %s53
      %s128 = sor.u32 %s126, %s127
      %s129 = ssub.s32 %s35, %s49
      %s130 = sor.u32 %s128, %s129
      %p131 = scmp.eq.s32.totalorder %s130, 0
      %s133 = sadd.s32 %s132, 1
      %s134 = scalar_select %p131, %s132, %s133
      %p137 = pneg %p131
      %p138 = scmp.eq.s32.totalorder %s27, 3
      %p139 = por %p137, %p138
      %p140 = scmp.ne.s32.totalorder %s132, %s135
      %p141 = scmp.eq.s32.totalorder %s27, 0
      %p142 = por %p140, %p141
      %p143 = scmp.ne.s32.totalorder %s132, %s135
      %p144 = scmp.eq.s32.totalorder %s32, 3
      %p145 = por %p143, %p144
      %p146 = scmp.ne.s32.totalorder %s135, %s136
      %p147 = scmp.eq.s32.totalorder %s32, 0
      %p148 = por %p146, %p147
      %p149 = scmp.ne.s32.totalorder %s135, %s136
      %p150 = scmp.eq.s32.totalorder %s33, 3
      %p151 = por %p149, %p150
      %p153 = scmp.ne.s32.totalorder %s136, %s152
      %p154 = scmp.eq.s32.totalorder %s33, 0
      %p155 = por %p153, %p154
      %s156 = ssub.s32 %s35, %s49
      %p157 = scmp.eq.s32.totalorder %s156, 0
      %s159 = sadd.s32 %s158, 1
      %s160 = scalar_select %p157, %s158, %s159
      %p163 = pneg %p157
      %p164 = scmp.eq.s32.totalorder %s27, 3
      %p165 = por %p163, %p164
      %p166 = scmp.ne.s32.totalorder %s158, %s161
      %p167 = scmp.eq.s32.totalorder %s27, 0
      %p168 = por %p166, %p167
      %p169 = scmp.ne.s32.totalorder %s158, %s161
      %p170 = scmp.eq.s32.totalorder %s32, 3
      %p171 = por %p169, %p170
      %p172 = scmp.ne.s32.totalorder %s161, %s162
      %p173 = scmp.eq.s32.totalorder %s32, 0
      %p174 = por %p172, %p173
      %p175 = scmp.ne.s32.totalorder %s161, %s162
      %p176 = scmp.eq.s32.totalorder %s33, 3
      %p177 = por %p175, %p176
      %p179 = scmp.ne.s32.totalorder %s162, %s178
      %p180 = scmp.eq.s32.totalorder %s33, 0
      %p181 = por %p179, %p180
      %s182 = ssub.s32 %s36, %s45
      %s183 = ssub.s32 %s34, %s53
      %s184 = sor.u32 %s182, %s183
      %s185 = ssub.s32 %s35, %s49
      %s186 = sor.u32 %s184, %s185
      %p187 = scmp.eq.s32.totalorder %s186, 0
      %s189 = sadd.s32 %s188, 1
      %s190 = scalar_select %p187, %s188, %s189
      %p193 = pneg %p187
      %p194 = scmp.eq.s32.totalorder %s27, 3
      %p195 = por %p193, %p194
      %p196 = scmp.ne.s32.totalorder %s188, %s191
      %p197 = scmp.eq.s32.totalorder %s27, 0
      %p198 = por %p196, %p197
      %p199 = scmp.ne.s32.totalorder %s188, %s191
      %p200 = scmp.eq.s32.totalorder %s32, 3
      %p201 = por %p199, %p200
      %p202 = scmp.ne.s32.totalorder %s191, %s192
      %p203 = scmp.eq.s32.totalorder %s32, 0
      %p204 = por %p202, %p203
      %p205 = scmp.ne.s32.totalorder %s191, %s192
      %p206 = scmp.eq.s32.totalorder %s33, 3
      %p207 = por %p205, %p206
      %p209 = scmp.ne.s32.totalorder %s192, %s208
      %p210 = scmp.eq.s32.totalorder %s33, 0
      %p211 = por %p209, %p210
      %s212 = ssub.s32 %s36, %s45
      %s213 = ssub.s32 %s34, %s53
      %s214 = sor.u32 %s212, %s213
      %s215 = ssub.s32 %s35, %s49
      %s216 = sor.u32 %s214, %s215
      %p217 = scmp.eq.s32.totalorder %s216, 0
      %s219 = sadd.s32 %s218, 1
      %s220 = scalar_select %p217, %s218, %s219
      %p223 = pneg %p217
      %p224 = scmp.eq.s32.totalorder %s27, 3
      %p225 = por %p223, %p224
      %p226 = scmp.ne.s32.totalorder %s218, %s221
      %p227 = scmp.eq.s32.totalorder %s27, 0
      %p228 = por %p226, %p227
      %p229 = scmp.ne.s32.totalorder %s218, %s221
      %p230 = scmp.eq.s32.totalorder %s32, 3
      %p231 = por %p229, %p230
      %p232 = scmp.ne.s32.totalorder %s221, %s222
      %p233 = scmp.eq.s32.totalorder %s32, 0
      %p234 = por %p232, %p233
      %p235 = scmp.ne.s32.totalorder %s221, %s222
      %p236 = scmp.eq.s32.totalorder %s33, 3
      %p237 = por %p235, %p236
      %p239 = scmp.ne.s32.totalorder %s222, %s238
      %p240 = scmp.eq.s32.totalorder %s33, 0
      %p241 = por %p239, %p240
      %p242 = scmp.le.s32.totalorder 1, %s27
      %p243 = scmp.lt.s32.totalorder %s27, 5
      %p244 = pnand %p242, %p243
      %p245 = pneg %p244
      // Predicated region
      $region9: #{tpu_custom_call.1} parent=5 // pred_check
        _
      $region10: #{tpu_custom_call.1} parent=5 // pred_check_branch
        %247 = sbr.rel (%p244) target = $region12
      $region11: #{tpu_custom_call.1} parent=5 // pred_region
        %s248 = ssub.s32 %s27, 1
        // Predicated region
        $region13: #{tpu_custom_call.1} parent=11 // pred_check
          %p249 = pneg %p67
        $region14: #{tpu_custom_call.1} parent=11 // pred_check_branch
          %251 = sbr.rel (%p249) target = $region16
        $region15: #{tpu_custom_call.1} parent=11 // pred_region
          %253 = vsyncadd [#allocation8], 0
          %s255 = sshll.u32 %s0, 4
          %s256 = int_to_ptr.hbm [resolvable:$true] %s255
          %258 = dma.hbm_to_smem %s256, 16, [#allocation5], [#allocation8]
        $region16: #{tpu_custom_call.1} parent=11 // pred_fallthru
          _
        // Predicated region
        $region17: #{tpu_custom_call.1} parent=11 // pred_check
          %p259 = pneg %p88
        $region18: #{tpu_custom_call.1} parent=11 // pred_check_branch
          %261 = sbr.rel (%p259) target = $region20
        $region19: #{tpu_custom_call.1} parent=11 // pred_region
          _
        $region20: #{tpu_custom_call.1} parent=11 // pred_fallthru
          _
        // Predicated region
        $region21: #{tpu_custom_call.1} parent=11 // pred_check
          %p262 = pneg %p174
        $region22: #{tpu_custom_call.1} parent=11 // pred_check_branch
          %264 = sbr.rel (%p262) target = $region24
        $region23: #{tpu_custom_call.1} parent=11 // pred_region
          %p265 = scmp.lt.s32.totalorder %s38, 0
          %s266 = scalar_select %p265, %s38, 0
          %s267 = smul.addr %s266, 2
          %s268 = scalar_lea.vmem %s4, %s267
        $region24: #{tpu_custom_call.1} parent=11 // pred_fallthru
          _
      $region12: #{tpu_custom_call.1} parent=5 // pred_fallthru
        _
      %p269 = scmp.lt.s32.totalorder %s27, 4
      // Predicated region
      $region25: #{tpu_custom_call.1} parent=5 // pred_check
        %p270 = pneg %p269
      $region26: #{tpu_custom_call.1} parent=5 // pred_check_branch
        %272 = sbr.rel (%p270) target = $region28
      $region27: #{tpu_custom_call.1} parent=5 // pred_region
        // Predicated region
        $region29: #{tpu_custom_call.1} parent=27 // pred_check
          %p273 = pneg %p112
        $region30: #{tpu_custom_call.1} parent=27 // pred_check_branch
          %275 = sbr.rel (%p273) target = $region32
        $region31: #{tpu_custom_call.1} parent=27 // pred_region
          %s276 = sand.u32 %s102, 1
          %s277 = scalar_lea.sflag [#allocation6], %s276
          %s278 = sand.u32 %s102, 1
          %s279 = smul.addr %s278, 4
          %s280 = scalar_lea.vmem [#allocation9], %s279
          %s281 = smul.u32 2, %s36
          %283 = vsyncadd %s277, 0
          %s284 = sadd.s32 %s35, %s34
          %s285 = smul.addr %s281, 4
          %s286 = sadd.s32 %s284, %s285
          %s287 = smul.addr %s286, 2
          %s288 = scalar_lea.hbm %s2, %s287
          %s289 = sshll.u32 %s288, 4
          %s290 = int_to_ptr.hbm [resolvable:$true] %s289
          %s291 = sshll.u32 %s280, 4
          %s292 = int_to_ptr.vmem [resolvable:$true] %s291
          %297 = dma.hbm_to_vmem [thread:$0]  %s290, 64, %s292, %s277, 128, 32, 2
        $region32: #{tpu_custom_call.1} parent=27 // pred_fallthru
          _
        // Predicated region
        $region33: #{tpu_custom_call.1} parent=27 // pred_check
          %p298 = pneg %p142
        $region34: #{tpu_custom_call.1} parent=27 // pred_check_branch
          %300 = sbr.rel (%p298) target = $region36
        $region35: #{tpu_custom_call.1} parent=27 // pred_region
          %s301 = sand.u32 %s132, 1
          %s302 = scalar_lea.sflag [#allocation11], %s301
          %s303 = sand.u32 %s132, 1
          %s304 = smul.addr %s303, 4
          %s305 = scalar_lea.vmem [#allocation10], %s304
          %s306 = smul.u32 2, %s36
          %308 = vsyncadd %s302, 0
          %s309 = sadd.s32 %s35, %s34
          %s310 = smul.addr %s306, 4
          %s311 = sadd.s32 %s309, %s310
          %s312 = smul.addr %s311, 2
          %s313 = scalar_lea.hbm %s3, %s312
          %s314 = sshll.u32 %s313, 4
          %s315 = int_to_ptr.hbm [resolvable:$true] %s314
          %s316 = sshll.u32 %s305, 4
          %s317 = int_to_ptr.vmem [resolvable:$true] %s316
          %322 = dma.hbm_to_vmem [thread:$0]  %s315, 64, %s317, %s302, 128, 32, 2
        $region36: #{tpu_custom_call.1} parent=27 // pred_fallthru
          _
      $region28: #{tpu_custom_call.1} parent=5 // pred_fallthru
        _
      %p323 = scmp.le.s32.totalorder 1, %s27
      %p324 = scmp.lt.s32.totalorder %s27, 5
      %p325 = pnand %p323, %p324
      %p326 = pneg %p325
      // Predicated region
      $region37: #{tpu_custom_call.1} parent=5 // pred_check
        _
      $region38: #{tpu_custom_call.1} parent=5 // pred_check_branch
        %328 = sbr.rel (%p325) target = $region40
      $region39: #{tpu_custom_call.1} parent=5 // pred_region
        %s329 = ssub.s32 %s27, 1
        // Predicated region
        $region41: #{tpu_custom_call.1} parent=39 // pred_check
          %p330 = pneg %p67
        $region42: #{tpu_custom_call.1} parent=39 // pred_check_branch
          %332 = sbr.rel (%p330) target = $region44
        $region43: #{tpu_custom_call.1} parent=39 // pred_region
          %334 = dma.done [#allocation8], 16
        $region44: #{tpu_custom_call.1} parent=39 // pred_fallthru
          _
        %s335 = sand.u32 %s105, 1
        %s336 = scalar_lea.sflag [#allocation6], %s335
        %s337 = sand.u32 %s105, 1
        %s338 = smul.addr %s337, 4
        %s339 = scalar_lea.vmem [#allocation9], %s338
        // Predicated region
        $region45: #{tpu_custom_call.1} parent=39 // pred_check
          %p340 = pneg %p118
        $region46: #{tpu_custom_call.1} parent=39 // pred_check_branch
          %342 = sbr.rel (%p340) target = $region48
        $region47: #{tpu_custom_call.1} parent=39 // pred_region
          %344 = dma.done %s336, 64
        $region48: #{tpu_custom_call.1} parent=39 // pred_fallthru
          _
        %s345 = sand.u32 %s135, 1
        %s346 = scalar_lea.sflag [#allocation11], %s345
        %s347 = sand.u32 %s135, 1
        %s348 = smul.addr %s347, 4
        %s349 = scalar_lea.vmem [#allocation10], %s348
        // Predicated region
        $region49: #{tpu_custom_call.1} parent=39 // pred_check
          %p350 = pneg %p148
        $region50: #{tpu_custom_call.1} parent=39 // pred_check_branch
          %352 = sbr.rel (%p350) target = $region52
        $region51: #{tpu_custom_call.1} parent=39 // pred_region
          %354 = dma.done %s346, 64
        $region52: #{tpu_custom_call.1} parent=39 // pred_fallthru
          _
        %355 = sfence
        %p356 = pneg %p67
        %p357 = pneg %p64
        %p358 = pneg %p88
        %p359 = pneg %p85
        %s360 = sand.u32 %s105, 1
        %s361 = scalar_lea.sflag [#allocation6], %s360
        %s362 = sand.u32 %s105, 1
        %s363 = smul.addr %s362, 4
        %s364 = scalar_lea.vmem [#allocation9], %s363
        %p365 = pneg %p118
        %p366 = pneg %p115
        %s367 = sand.u32 %s135, 1
        %s368 = scalar_lea.sflag [#allocation11], %s367
        %s369 = sand.u32 %s135, 1
        %s370 = smul.addr %s369, 4
        %s371 = scalar_lea.vmem [#allocation10], %s370
        %p372 = pneg %p148
        %p373 = pneg %p145
        %p374 = scmp.lt.s32.totalorder %s38, 0
        %s375 = scalar_select %p374, %s38, 0
        %s376 = smul.addr %s375, 2
        %s377 = scalar_lea.vmem %s4, %s376
        %p378 = pneg %p174
        %p379 = pneg %p171
        %p380 = pneg %p204
        %p381 = pneg %p201
        %s382 = sand.u32 %s191, 1
        %s383 = scalar_lea.sflag [#allocation7], %s382
        %s384 = sand.u32 %s191, 1
        %s385 = smul.addr %s384, 4
        %s386 = scalar_lea.vmem [#allocation12], %s385
        %p387 = pneg %p234
        %p388 = pneg %p231
        %s389 = sand.u32 %s221, 1
        %s390 = scalar_lea.sflag [#allocation14], %s389
        %s391 = sand.u32 %s221, 1
        %s392 = smul.addr %s391, 4
        %s393 = scalar_lea.vmem [#allocation13], %s392
        %s394 = smul.u32 2, %s39
        %s395 = smul.u32 2, %s39
        %p396 = scmp.lt.s32.totalorder %s38, 0
        %s397 = scalar_select %p396, %s38, 0
        %s398 = smul.addr %s397, 2
        %s399 = scalar_lea.vmem %s4, %s398
        %s400 = smul.u32 2, %s39
        %s401 = smul.u32 2, %s39
        %s402 = sld [smem:[#allocation5 + %s37]]
        %s403 = sld [smem:[#allocation4]]
        %v404 = vstv %s402
        %v405 = vrcp.pop %v404
        %v406 = vmul.f32 %v404, %v405
        %v407 = vsub.f32 1.0, %v406
        %v408 = vmul.f32 %v405, %v407
        %v409 = vadd.f32 %v405, %v408
        %vm410 = vweird.f32 %v404
        %vm411 = vweird.f32 %v405
        %vm412 = vmor %vm410, %vm411
        %v413 = vsel %vm412, %v405, %v409
        %v414 = vand.u32 2147483647, %v404
        %vm415 = vcmp.eq.f32.partialorder %v414, 8.507059e+37
        %v416 = vand.u32 %v404, 2147483648
        %v417 = vor.u32 1.1754944e-38, %v416
        %v418 = vsel %vm415, %v417, %v413
        %s419 = vtos %v418
        %s420 = smul.f32 6.2831855, %s419
        %p421 = scmp.eq.s32.totalorder %s39, 0
        // Predicated region
        $region53: #{tpu_custom_call.1} parent=39 // pred_check
          %p422 = pneg %p421
        $region54: #{tpu_custom_call.1} parent=39 // pred_check_branch
          %424 = sbr.rel (%p422) target = $region56
        $region55: #{tpu_custom_call.1} parent=39 // pred_region
          %v425 = vld [vmem:[%s399] sm:$0x3]
          %s426 = scalar_lea.vmem %s399, 2
          %v427 = vld [vmem:[%s426] sm:$0x3]
          %s428 = smul.f32 %s420, -0.5
          %v429 = vstv %s428
          %v430 = vmul.f32 %v429, %v425
          %v431 = vmul.f32 %v430, 0.01
          %v432 = vmul.f32 %v431, 1.7320508
          %v433 = vmul.f32 %v432, 1.442695
          %v434 = vpow.pop %v433
          %s435 = ssub.f32 0.0, %s420
          %v436 = vmul.f32 %v425, 0.7320508
          %v437 = vstv %s403
          %v438 = vadd.f32 %v436, %v437
          %v439 = vstv %s435
          %v440 = vmul.f32 %v439, %v438
          %v441 = vand.u32 2147483647, %v440
          %vm442 = vcmp.le.f32.partialorder %v441, 0.7853982
          %vm443 = vcmp.lt.s32.totalorder %v440, 0
          %v444 = vand.u32 %v440, 2139095040
          %v445 = vshrl.u32 %v444, 23
          %v446 = vsub.s32 %v445, 127
          %v447 = vand.u32 2147483647, %v440
          %v448 = vand.u32 %v447, 8388607
          %v449 = vor.u32 %v448, 8388608
          %v450 = vsub.s32 0, %v449
          %v451 = vadd.s32 %v446, 1
          %vm452 = vcmp.gt.s32.totalorder %v451, 0
          %v453 = vsel %vm452, %v451, 0
          %v454 = vshrl.u32 %v453, 5
          %v455 = vand.u32 %v453, 31
          %v456 = vsub.s32 32, %v455
          %v457 = vshrl.u32 683565275, %v456
          %v458 = vshll.u32 683565275, %v455
          %v459 = vshrl.u32 2475754826, %v456
          %v460 = vor.u32 %v458, %v459
          %v461 = vshll.u32 2475754826, %v455
          %v462 = vshrl.u32 2131351028, %v456
          %v463 = vor.u32 %v461, %v462
          %v464 = vshll.u32 2131351028, %v455
          %v465 = vshrl.u32 2102212464, %v456
          %v466 = vor.u32 %v464, %v465
          %v467 = vshll.u32 2102212464, %v455
          %v468 = vshrl.u32 920167782, %v456
          %v469 = vor.u32 %v467, %v468
          %v470 = vshll.u32 920167782, %v455
          %v471 = vshrl.u32 1326507024, %v456
          %v472 = vor.u32 %v470, %v471
          %vm473 = vcmp.lt.s32.totalorder %v454, 1
          %vm474 = vcmp.lt.s32.totalorder %v454, 2
          %vm475 = vcmp.lt.s32.totalorder %v454, 3
          %vm476 = vcmp.lt.s32.totalorder %v454, 4
          %v477 = vsel %vm473, %v457, %v460
          %v478 = vsel %vm476, %v466, 2102212464
          %v479 = vsel %vm475, %v463, %v478
          %v480 = vsel %vm474, %v477, %v479
          %v481 = vsel %vm473, %v460, %v463
          %v482 = vsel %vm476, %v469, 920167782
          %v483 = vsel %vm475, %v466, %v482
          %v484 = vsel %vm474, %v481, %v483
          %v485 = vsel %vm473, %v463, %v466
          %v486 = vsel %vm476, %v472, 1326507024
          %v487 = vsel %vm475, %v469, %v486
          %v488 = vsel %vm474, %v485, %v487
          %v489 = vshll.u32 %v449, 8
          %v490 = vand.u32 %v489, 65535
          %v491 = vshrl.u32 %v489, 16
          %v492 = vand.u32 %v488, 65535
          %v493 = vshrl.u32 %v488, 16
          %v494 = vmul.u32 %v490, %v492
          %v495 = vmul.u32 %v490, %v493
          %v496 = vmul.u32 %v491, %v492
          %v497 = vmul.u32 %v491, %v493
          %v498 = vshll.u32 %v495, 16
          %v499 = vshrl.u32 %v495, 16
          %v500 = vshll.u32 %v496, 16
          %v501 = vshrl.u32 %v496, 16
          %vm502 = vc.u32 %v494, %v498
          %v503 = vsel %vm502, 1, 0
          %v504 = vadd.s32 %v494, %v498
          %v505 = vadd.s32 %v497, %v503
          %vm506 = vc.u32 %v504, %v500
          %v507 = vsel %vm506, 1, 0
          %v508 = vadd.s32 %v504, %v500
          %v509 = vadd.s32 %v505, %v507
          %v510 = vadd.s32 %v509, %v499
          %v511 = vadd.s32 %v510, %v501
          %v512 = vand.u32 %v489, 65535
          %v513 = vshrl.u32 %v489, 16
          %v514 = vand.u32 %v484, 65535
          %v515 = vshrl.u32 %v484, 16
          %v516 = vmul.u32 %v512, %v514
          %v517 = vmul.u32 %v512, %v515
          %v518 = vmul.u32 %v513, %v514
          %v519 = vmul.u32 %v513, %v515
          %v520 = vshll.u32 %v517, 16
          %v521 = vshrl.u32 %v517, 16
          %v522 = vshll.u32 %v518, 16
          %v523 = vshrl.u32 %v518, 16
          %vm524 = vc.u32 %v516, %v520
          %v525 = vsel %vm524, 1, 0
          %v526 = vadd.s32 %v516, %v520
          %v527 = vadd.s32 %v519, %v525
          %vm528 = vc.u32 %v526, %v522
          %v529 = vsel %vm528, 1, 0
          %v530 = vadd.s32 %v526, %v522
          %v531 = vadd.s32 %v527, %v529
          %v532 = vadd.s32 %v531, %v521
          %v533 = vadd.s32 %v532, %v523
          %v534 = vmul.u32 %v489, %v480
          %v535 = vadd.s32 %v511, %v530
          %vm536 = vc.u32 %v511, %v530
          %v537 = vadd.s32 %v533, 1
          %v538 = vsel %vm536, %v537, %v533
          %v539 = vadd.s32 %v534, %v538
          %v540 = vadd.s32 %v539, 536870912
          %v541 = vshrl.u32 %v540, 30
          %v542 = vshll.u32 %v541, 30
          %v543 = vsub.s32 %v539, %v542
          %vm544 = vcmp.lt.s32.totalorder %v543, 0
          %v545 = vsub.s32 0, %v543
          %v546 = vsel %vm544, %v545, %v543
          %v547 = vclz %v546
          %v548 = vsub.s32 %v547, 2
          %vm549 = vcmp.gt.s32.totalorder 0, %v548
          %v550 = vsel %vm549, 0, %v548
          %v551 = vsub.s32 32, %v550
          %v552 = vshll.u32 %v543, %v550
          %v553 = vshrl.u32 %v535, %v551
          %v554 = vor.u32 %v552, %v553
          %v555 = vsub.s32 4294967266, %v550
          %v556 = vadd.s32 %v555, 127
          %v557 = vshll.u32 %v556, 23
          %v558 = vor.u32 4788187, %v557
          %v559 = vand.u32 2147483647, %v558
          %v561 = vcvt.s32.f32 %v554
          %v562 = vmul.f32 %v561, %v559
          %v563 = vxor.u32 %v562, 2147483648
          %v564 = vsel %vm443, %v563, %v562
          %v565 = vsub.s32 4, %v541
          %v566 = vsel %vm443, %v565, %v541
          %v567 = vsel %vm442, %v440, %v564
          %v568 = vsel %vm442, 0, %v566
          %v569 = vmul.f32 %v567, %v567
          %v570 = vmul.f32 %v569, -0.001358992
          %v571 = vadd.f32 %v570, 0.041655596
          %v572 = vmul.f32 %v569, %v571
          %v573 = vadd.f32 %v572, -0.4999988
          %v574 = vmul.f32 %v569, %v573
          %v575 = vadd.f32 1.0, %v574
          %v576 = vmul.f32 %v567, %v567
          %v577 = vmul.f32 %v576, -0.00019511016
          %v578 = vadd.f32 %v577, 0.008332121
          %v579 = vmul.f32 %v576, %v578
          %v580 = vadd.f32 %v579, -0.16666654
          %v581 = vmul.f32 %v576, %v580
          %v582 = vadd.f32 %v581, 1.0
          %v583 = vmul.f32 %v582, %v567
          %vm584 = vweird.f32 %v440
          %v585 = vand.u32 %v568, 3
          %vm586 = vcmp.lt.s32.totalorder %v585, 2
          %vm587 = vcmp.eq.s32.totalorder %v585, 0
          %v588 = vxor.u32 %v583, 2147483648
          %v589 = vsel %vm587, %v575, %v588
          %vm590 = vcmp.eq.s32.totalorder %v585, 2
          %v591 = vxor.u32 %v575, 2147483648
          %v592 = vsel %vm590, %v591, %v583
          %v593 = vsel %vm586, %v589, %v592
          %v594 = vsel %vm584, nan, %v593
          %v595 = vmul.f32 %v434, %v594
          %v596 = vmul.f32 %v427, %v595
          %597 = vst [vmem:[#allocation2] sm:$0x3] %v596
          %v598 = vand.u32 2147483647, %v440
          %vm599 = vcmp.le.f32.partialorder %v598, 0.7853982
          %vm600 = vcmp.lt.s32.totalorder %v440, 0
          %v601 = vand.u32 %v440, 2139095040
          %v602 = vshrl.u32 %v601, 23
          %v603 = vsub.s32 %v602, 127
          %v604 = vand.u32 2147483647, %v440
          %v605 = vand.u32 %v604, 8388607
          %v606 = vor.u32 %v605, 8388608
          %v607 = vsub.s32 0, %v606
          %v608 = vadd.s32 %v603, 1
          %vm609 = vcmp.gt.s32.totalorder %v608, 0
          %v610 = vsel %vm609, %v608, 0
          %v611 = vshrl.u32 %v610, 5
          %v612 = vand.u32 %v610, 31
          %v613 = vsub.s32 32, %v612
          %v614 = vshrl.u32 683565275, %v613
          %v615 = vshll.u32 683565275, %v612
          %v616 = vshrl.u32 2475754826, %v613
          %v617 = vor.u32 %v615, %v616
          %v618 = vshll.u32 2475754826, %v612
          %v619 = vshrl.u32 2131351028, %v613
          %v620 = vor.u32 %v618, %v619
          %v621 = vshll.u32 2131351028, %v612
          %v622 = vshrl.u32 2102212464, %v613
          %v623 = vor.u32 %v621, %v622
          %v624 = vshll.u32 2102212464, %v612
          %v625 = vshrl.u32 920167782, %v613
          %v626 = vor.u32 %v624, %v625
          %v627 = vshll.u32 920167782, %v612
          %v628 = vshrl.u32 1326507024, %v613
          %v629 = vor.u32 %v627, %v628
          %vm630 = vcmp.lt.s32.totalorder %v611, 1
          %vm631 = vcmp.lt.s32.totalorder %v611, 2
          %vm632 = vcmp.lt.s32.totalorder %v611, 3
          %vm633 = vcmp.lt.s32.totalorder %v611, 4
          %v634 = vsel %vm630, %v614, %v617
          %v635 = vsel %vm633, %v623, 2102212464
          %v636 = vsel %vm632, %v620, %v635
          %v637 = vsel %vm631, %v634, %v636
          %v638 = vsel %vm630, %v617, %v620
          %v639 = vsel %vm633, %v626, 920167782
          %v640 = vsel %vm632, %v623, %v639
          %v641 = vsel %vm631, %v638, %v640
          %v642 = vsel %vm630, %v620, %v623
          %v643 = vsel %vm633, %v629, 1326507024
          %v644 = vsel %vm632, %v626, %v643
          %v645 = vsel %vm631, %v642, %v644
          %v646 = vshll.u32 %v606, 8
          %v647 = vand.u32 %v646, 65535
          %v648 = vshrl.u32 %v646, 16
          %v649 = vand.u32 %v645, 65535
          %v650 = vshrl.u32 %v645, 16
          %v651 = vmul.u32 %v647, %v649
          %v652 = vmul.u32 %v647, %v650
          %v653 = vmul.u32 %v648, %v649
          %v654 = vmul.u32 %v648, %v650
          %v655 = vshll.u32 %v652, 16
          %v656 = vshrl.u32 %v652, 16
          %v657 = vshll.u32 %v653, 16
          %v658 = vshrl.u32 %v653, 16
          %vm659 = vc.u32 %v651, %v655
          %v660 = vsel %vm659, 1, 0
          %v661 = vadd.s32 %v651, %v655
          %v662 = vadd.s32 %v654, %v660
          %vm663 = vc.u32 %v661, %v657
          %v664 = vsel %vm663, 1, 0
          %v665 = vadd.s32 %v661, %v657
          %v666 = vadd.s32 %v662, %v664
          %v667 = vadd.s32 %v666, %v656
          %v668 = vadd.s32 %v667, %v658
          %v669 = vand.u32 %v646, 65535
          %v670 = vshrl.u32 %v646, 16
          %v671 = vand.u32 %v641, 65535
          %v672 = vshrl.u32 %v641, 16
          %v673 = vmul.u32 %v669, %v671
          %v674 = vmul.u32 %v669, %v672
          %v675 = vmul.u32 %v670, %v671
          %v676 = vmul.u32 %v670, %v672
          %v677 = vshll.u32 %v674, 16
          %v678 = vshrl.u32 %v674, 16
          %v679 = vshll.u32 %v675, 16
          %v680 = vshrl.u32 %v675, 16
          %vm681 = vc.u32 %v673, %v677
          %v682 = vsel %vm681, 1, 0
          %v683 = vadd.s32 %v673, %v677
          %v684 = vadd.s32 %v676, %v682
          %vm685 = vc.u32 %v683, %v679
          %v686 = vsel %vm685, 1, 0
          %v687 = vadd.s32 %v683, %v679
          %v688 = vadd.s32 %v684, %v686
          %v689 = vadd.s32 %v688, %v678
          %v690 = vadd.s32 %v689, %v680
          %v691 = vmul.u32 %v646, %v637
          %v692 = vadd.s32 %v668, %v687
          %vm693 = vc.u32 %v668, %v687
          %v694 = vadd.s32 %v690, 1
          %v695 = vsel %vm693, %v694, %v690
          %v696 = vadd.s32 %v691, %v695
          %v697 = vadd.s32 %v696, 536870912
          %v698 = vshrl.u32 %v697, 30
          %v699 = vshll.u32 %v698, 30
          %v700 = vsub.s32 %v696, %v699
          %vm701 = vcmp.lt.s32.totalorder %v700, 0
          %v702 = vsub.s32 0, %v700
          %v703 = vsel %vm701, %v702, %v700
          %v704 = vclz %v703
          %v705 = vsub.s32 %v704, 2
          %vm706 = vcmp.gt.s32.totalorder 0, %v705
          %v707 = vsel %vm706, 0, %v705
          %v708 = vsub.s32 32, %v707
          %v709 = vshll.u32 %v700, %v707
          %v710 = vshrl.u32 %v692, %v708
          %v711 = vor.u32 %v709, %v710
          %v712 = vsub.s32 4294967266, %v707
          %v713 = vadd.s32 %v712, 127
          %v714 = vshll.u32 %v713, 23
          %v715 = vor.u32 4788187, %v714
          %v716 = vand.u32 2147483647, %v715
          %v718 = vcvt.s32.f32 %v711
          %v719 = vmul.f32 %v718, %v716
          %v720 = vxor.u32 %v719, 2147483648
          %v721 = vsel %vm600, %v720, %v719
          %v722 = vsub.s32 4, %v698
          %v723 = vsel %vm600, %v722, %v698
          %v724 = vsel %vm599, %v440, %v721
          %v725 = vsel %vm599, 0, %v723
          %v726 = vmul.f32 %v724, %v724
          %v727 = vmul.f32 %v726, -0.001358992
          %v728 = vadd.f32 %v727, 0.041655596
          %v729 = vmul.f32 %v726, %v728
          %v730 = vadd.f32 %v729, -0.4999988
          %v731 = vmul.f32 %v726, %v730
          %v732 = vadd.f32 1.0, %v731
          %v733 = vmul.f32 %v724, %v724
          %v734 = vmul.f32 %v733, -0.00019511016
          %v735 = vadd.f32 %v734, 0.008332121
          %v736 = vmul.f32 %v733, %v735
          %v737 = vadd.f32 %v736, -0.16666654
          %v738 = vmul.f32 %v733, %v737
          %v739 = vadd.f32 %v738, 1.0
          %v740 = vmul.f32 %v739, %v724
          %vm741 = vweird.f32 %v440
          %v742 = vadd.s32 %v725, 3
          %v743 = vand.u32 %v742, 3
          %vm744 = vcmp.lt.s32.totalorder %v743, 2
          %vm745 = vcmp.eq.s32.totalorder %v743, 0
          %v746 = vxor.u32 %v740, 2147483648
          %v747 = vsel %vm745, %v732, %v746
          %vm748 = vcmp.eq.s32.totalorder %v743, 2
          %v749 = vxor.u32 %v732, 2147483648
          %v750 = vsel %vm748, %v749, %v740
          %v751 = vsel %vm744, %v747, %v750
          %v752 = vsel %vm741, nan, %v751
          %v753 = vmul.f32 %v434, %v752
          %v754 = vmul.f32 %v427, %v753
          %755 = vst [vmem:[#allocation3] sm:$0x3] %v754
        $region56: #{tpu_custom_call.1} parent=39 // pred_fallthru
          _
        %v756 = vld [vmem:[%s339] sm:$0x3]
        %v757 = vld [vmem:[%s339 + $0x2] sm:$0x3]
        %v758 = vld [vmem:[%s349] sm:$0x3]
        %v759 = vld [vmem:[%s349 + $0x2] sm:$0x3]
        %v760 = vld [vmem:[#allocation2] sm:$0x3]
        %v761 = vld [vmem:[#allocation3] sm:$0x3]
        %v762 = vmul.f32 %v756, %v760
        %v763 = vmul.f32 %v757, %v760
        %v764 = vmul.f32 %v758, %v761
        %v765 = vmul.f32 %v759, %v761
        %v766 = vsub.f32 %v762, %v764
        %v767 = vsub.f32 %v763, %v765
        %768 = vst [vmem:[%s386] sm:$0x3] %v766
        %769 = vst [vmem:[%s386 + $0x2] sm:$0x3] %v767
        %v770 = vmul.f32 %v756, %v761
        %v771 = vmul.f32 %v757, %v761
        %v772 = vmul.f32 %v758, %v760
        %v773 = vmul.f32 %v759, %v760
        %v774 = vadd.f32 %v770, %v772
        %v775 = vadd.f32 %v771, %v773
        %776 = vst [vmem:[%s393] sm:$0x3] %v774
        %777 = vst [vmem:[%s393 + $0x2] sm:$0x3] %v775
        %s778 = sand.u32 %s191, 1
        %s779 = scalar_lea.sflag [#allocation7], %s778
        %s780 = sand.u32 %s191, 1
        %s781 = smul.addr %s780, 4
        %s782 = scalar_lea.vmem [#allocation12], %s781
        %s783 = sand.u32 %s221, 1
        %s784 = scalar_lea.sflag [#allocation14], %s783
        %s785 = sand.u32 %s221, 1
        %s786 = smul.addr %s785, 4
        %s787 = scalar_lea.vmem [#allocation13], %s786
        // Predicated region
        $region57: #{tpu_custom_call.1} parent=39 // pred_check
          %p788 = pneg %p201
        $region58: #{tpu_custom_call.1} parent=39 // pred_check_branch
          %790 = sbr.rel (%p788) target = $region60
        $region59: #{tpu_custom_call.1} parent=39 // pred_region
          %s791 = smul.u32 2, %s39
          %793 = vsyncadd %s779, 0
          %s794 = sadd.s32 %s38, %s37
          %s795 = smul.addr %s791, 4
          %s796 = sadd.s32 %s794, %s795
          %s797 = smul.addr %s796, 2
          %s798 = scalar_lea.hbm %s5, %s797
          %s799 = sshll.u32 %s782, 4
          %s800 = int_to_ptr.vmem [resolvable:$true] %s799
          %s801 = sshll.u32 %s798, 4
          %s802 = int_to_ptr.hbm [resolvable:$true] %s801
          %807 = dma.vmem_to_hbm [thread:$0]  %s800, 64, %s802, %s779, 32, 128, 2
        $region60: #{tpu_custom_call.1} parent=39 // pred_fallthru
          _
        // Predicated region
        $region61: #{tpu_custom_call.1} parent=39 // pred_check
          %p808 = pneg %p231
        $region62: #{tpu_custom_call.1} parent=39 // pred_check_branch
          %810 = sbr.rel (%p808) target = $region64
        $region63: #{tpu_custom_call.1} parent=39 // pred_region
          %s811 = smul.u32 2, %s39
          %813 = vsyncadd %s784, 0
          %s814 = sadd.s32 %s38, %s37
          %s815 = smul.addr %s811, 4
          %s816 = sadd.s32 %s814, %s815
          %s817 = smul.addr %s816, 2
          %s818 = scalar_lea.hbm %s6, %s817
          %s819 = sshll.u32 %s787, 4
          %s820 = int_to_ptr.vmem [resolvable:$true] %s819
          %s821 = sshll.u32 %s818, 4
          %s822 = int_to_ptr.hbm [resolvable:$true] %s821
          %827 = dma.vmem_to_hbm [thread:$0]  %s820, 64, %s822, %s784, 32, 128, 2
        $region64: #{tpu_custom_call.1} parent=39 // pred_fallthru
          _
      $region40: #{tpu_custom_call.1} parent=5 // pred_fallthru
        _
      %p828 = scmp.le.s32.totalorder 2, %s27
      // Predicated region
      $region65: #{tpu_custom_call.1} parent=5 // pred_check
        %p829 = pneg %p828
      $region66: #{tpu_custom_call.1} parent=5 // pred_check_branch
        %831 = sbr.rel (%p829) target = $region68
      $region67: #{tpu_custom_call.1} parent=5 // pred_region
        %s832 = ssub.s32 %s27, 2
        // Predicated region
        $region69: #{tpu_custom_call.1} parent=67 // pred_check
          %p833 = pneg %p207
        $region70: #{tpu_custom_call.1} parent=67 // pred_check_branch
          %835 = sbr.rel (%p833) target = $region72
        $region71: #{tpu_custom_call.1} parent=67 // pred_region
          %s836 = sand.u32 %s192, 1
          %s837 = scalar_lea.sflag [#allocation7], %s836
          %s838 = sand.u32 %s192, 1
          %s839 = smul.addr %s838, 4
          %s840 = scalar_lea.vmem [#allocation12], %s839
          %842 = dma.done %s837, 64
        $region72: #{tpu_custom_call.1} parent=67 // pred_fallthru
          _
        // Predicated region
        $region73: #{tpu_custom_call.1} parent=67 // pred_check
          %p843 = pneg %p237
        $region74: #{tpu_custom_call.1} parent=67 // pred_check_branch
          %845 = sbr.rel (%p843) target = $region76
        $region75: #{tpu_custom_call.1} parent=67 // pred_region
          %s846 = sand.u32 %s222, 1
          %s847 = scalar_lea.sflag [#allocation14], %s846
          %s848 = sand.u32 %s222, 1
          %s849 = smul.addr %s848, 4
          %s850 = scalar_lea.vmem [#allocation13], %s849
          %852 = dma.done %s847, 64
        $region76: #{tpu_custom_call.1} parent=67 // pred_fallthru
          _
      $region68: #{tpu_custom_call.1} parent=5 // pred_fallthru
        _
    $region6: #{tpu_custom_call.1} parent=1 // loop_footer
      %s31 = sadd.s32 1, %s27
    $region7: #{tpu_custom_call.1} parent=1 // loop_footer_branch
      %26 = sbr.rel target = $region3
    $region8: #{tpu_custom_call.1} parent=1 // loop_exit
      _
    %853 = vsyncpa [#allocation6], 1
    %s854 = scalar_lea.sflag [#allocation6], 1
    %855 = vsyncpa %s854, 1
    %856 = vsyncpa [#allocation11], 1
    %s857 = scalar_lea.sflag [#allocation11], 1
    %858 = vsyncpa %s857, 1
    %859 = vsyncpa [#allocation7], 1
    %s860 = scalar_lea.sflag [#allocation7], 1
    %861 = vsyncpa %s860, 1
    %862 = vsyncpa [#allocation14], 1
    %s863 = scalar_lea.sflag [#allocation14], 1
    %864 = vsyncpa %s863, 1
    %865 = vsyncpa [#allocation8], 1
    %s866 = scalar_lea.sflag [#allocation8], 1
    %867 = vsyncpa %s866, 1

</llo_original>
